<compile_context>
chip_gen: v5e
topology: v5e:2x2
jax: 0.10.0
libtpu: 0.0.40
codegen_flags: <defaults>
</compile_context>

<pallas_src>
import math

import jax
import jax.numpy as jnp
from jax.experimental import pallas as pl
from jax.experimental.pallas import tpu as pltpu


def make_positional_encoding_table(d_model, max_len=5000, dtype=jnp.float32):
    """Equivalent of the PyTorch module's __init__-time `pe` buffer."""
    position = jnp.arange(max_len, dtype=jnp.float32)[:, None]            # (max_len, 1)
    div_term = jnp.exp(jnp.arange(0, d_model, 2, dtype=jnp.float32)
                       * (-math.log(10000.0) / d_model))                  # (d_model//2,)
    pe = jnp.zeros((max_len, d_model), dtype=jnp.float32)
    pe = pe.at[:, 0::2].set(jnp.sin(position * div_term))
    pe = pe.at[:, 1::2].set(jnp.cos(position * div_term))
    return pe.astype(dtype)


def _divisors(n):
    out = set()
    i = 1
    while i * i <= n:
        if n % i == 0:
            out.add(i)
            out.add(n // i)
        i += 1
    return sorted(out)


def _choose_layout(B, L, itemsize, target_block_bytes):
    """Pick a lane-dense (R, C) flattening of the (B, S*D) problem + row-block tr.

    Guarantees: C | L (or C == L), tr | R, (tr % 8 == 0 or tr == R), and either
    rpb | tr or tr | rpb  (rpb = L // C = pe rows per batch element), so no
    padding, no ragged tail and a clean pe index_map are ever needed.
    """
    # ---- lane axis C ----
    if L % 128 == 0:
        q = L // 128
        cap = max(1, target_block_bytes // (8 * itemsize))   # keep >= 8 rows per block
        C = None
        for d in sorted(_divisors(q), reverse=True):          # prefer wide, dense rows
            c = 128 * d
            if c > cap:
                continue
            if (B * (L // c)) % 8 == 0:                        # full 8-sublane vregs
                C = c
                break
        if C is None:
            fitting = [128 * d for d in _divisors(q) if 128 * d <= cap]
            C = max(fitting) if fitting else 128
    else:
        # TODO(synk): d_model*seq not a multiple of 128 -> fall back to one flat
        # row per batch element (block dim == full array dim, so still legal).
        C = L
    rpb = L // C
    R = B * rpb

    # ---- row-block size tr ----
    cand = set(_divisors(rpb)) | {m * rpb for m in _divisors(B)}
    max_rows = max(1, target_block_bytes // (C * itemsize))
    valid = [t for t in sorted(cand) if t % 8 == 0 and t <= max_rows]
    if valid:
        resident = [t for t in valid if t % rpb == 0]          # these keep pe VMEM-resident
        pool = resident if resident else valid
        multi = [t for t in pool if R // t >= 2]               # >=2 blocks for v7x's 2 TCs
        tr = max(multi) if multi else max(pool)
    else:
        dense = [t for t in sorted(cand) if t % 8 == 0]
        tr = min(dense) if dense else R                        # tiny problems: one full block
    return C, rpb, R, tr


def _add_pe_kernel(x_ref, pe_ref, o_ref):
    o_ref[...] = (x_ref[...] + pe_ref[...]).astype(o_ref.dtype)


def _make_dropout_prng_kernel(keep_prob, threshold):
    inv_keep = 1.0 / keep_prob

    def kernel(seed_ref, x_ref, pe_ref, o_ref):
        y = x_ref[...] + pe_ref[...]
        # Two seed words -> decorrelated per-block streams.
        pltpu.prng_seed(seed_ref[0], pl.program_id(0))
        bits = pltpu.prng_random_bits(y.shape)
        if bits.dtype != jnp.uint32:
            bits = pltpu.bitcast(bits, jnp.uint32)
        keep = bits < jnp.uint32(threshold)                    # integer threshold, no i->f convert
        o_ref[...] = jnp.where(keep, y * inv_keep, 0.0).astype(o_ref.dtype)

    return kernel


def _make_dropout_bits_kernel(keep_prob, threshold):
    inv_keep = 1.0 / keep_prob

    def kernel(x_ref, pe_ref, bits_ref, o_ref):
        y = x_ref[...] + pe_ref[...]
        keep = bits_ref[...] < jnp.uint32(threshold)
        o_ref[...] = jnp.where(keep, y * inv_keep, 0.0).astype(o_ref.dtype)

    return kernel


def positional_encoding_forward(x, pe, *, dropout_p=0.0, seed=0,
                                target_block_bytes=2 << 20):
    """x: (B, S, D); pe: (max_len, D). Returns dropout(x + pe[:S], p), shape (B, S, D).

    `target_block_bytes` is a v7x-safe default (64 MiB VMEM); 4-8 MiB is fine on
    v5e / v6e (128 MiB VMEM).
    """
    B, S, D = x.shape
    assert S <= pe.shape[0] and D == pe.shape[1]
    L = S * D
    itemsize = jnp.dtype(x.dtype).itemsize

    C, rpb, R, tr = _choose_layout(B, L, itemsize, target_block_bytes)
    grid = R // tr

    # Metadata-only reshapes: no pad, no copy, lane axis a (multiple of) 128.
    x2 = x.reshape(R, C)
    pe2 = pe[:S].reshape(rpb, C)
    if pe2.dtype != x.dtype:
        pe2 = pe2.astype(x.dtype)

    if tr % rpb == 0:
        # Block spans whole batch elements: tile pe once (tiny, one-off) and keep
        # it resident in VMEM for the whole grid (constant index map -> no
        # per-step pe DMA, and the add needs no in-kernel broadcast).
        m = tr // rpb
        pe_blk = jnp.tile(pe2, (m, 1)) if m > 1 else pe2
        pe_spec = pl.BlockSpec((tr, C), lambda i, *_: (0, 0))
    else:
        # pe period larger than one block (very large S*D): stream matching tiles.
        nb = rpb // tr
        pe_blk = pe2
        pe_spec = pl.BlockSpec((tr, C), lambda i, *_: (i % nb, 0))

    xo_spec = pl.BlockSpec((tr, C), lambda i, *_: (i, 0))

    dropout_p = float(dropout_p)
    use_hw_prng = dropout_p > 0.0 and jax.default_backend() == "tpu"

    block_bytes = tr * C * itemsize
    pe_bytes = int(pe_blk.size) * itemsize
    extra_vmem = 0

    if dropout_p <= 0.0:
        kernel = _add_pe_kernel
        num_prefetch = 0
        in_specs = [xo_spec, pe_spec]
        args = (x2, pe_blk)
    else:
        keep_prob = 1.0 - dropout_p
        threshold = min(int(round(keep_prob * 2.0 ** 32)), 2 ** 32 - 1)
        if use_hw_prng:
            kernel = _make_dropout_prng_kernel(keep_prob, threshold)
            num_prefetch = 1
            in_specs = [xo_spec, pe_spec]
            args = (jnp.asarray([seed], jnp.int32), x2, pe_blk)
        else:
            # TODO(synk): pltpu.prng_* has no CPU/interpret lowering; off-TPU we
            # stream a precomputed mask-bits input instead of in-kernel PRNG.
            bits = jax.random.bits(jax.random.PRNGKey(seed), (R, C), jnp.uint32)
            kernel = _make_dropout_bits_kernel(keep_prob, threshold)
            num_prefetch = 0
            in_specs = [xo_spec, pe_spec, xo_spec]
            args = (x2, pe_blk, bits)
            extra_vmem = 2 * tr * C * 4

    need = 4 * block_bytes + 2 * pe_bytes + extra_vmem     # x + out double-buffered + pe (+bits)
    vmem_limit = int(min(max(need + (8 << 20), 32 << 20), 100 << 20))

    out2 = pl.pallas_call(
        kernel,
        out_shape=jax.ShapeDtypeStruct((R, C), x.dtype),
        grid_spec=pltpu.PrefetchScalarGridSpec(
            num_scalar_prefetch=num_prefetch,
            grid=(grid,),
            in_specs=in_specs,
            out_specs=xo_spec,
        ),
        compiler_params=pltpu.CompilerParams(
            dimension_semantics=("parallel",),
            vmem_limit_bytes=vmem_limit),
    )(*args)

    return out2.reshape(B, S, D)


if __name__ == "__main__":
    # Small shapes consistent with the module: batch=2, seq=8, d_model=32.
    B, S, D = 2, 8, 32
    max_len = 5000
    dropout_p = 0.25

    key = jax.random.PRNGKey(0)
    x = jax.random.normal(key, (B, S, D), dtype=jnp.float32)
    pe = make_positional_encoding_table(D, max_len=max_len)

    ref = x + pe[:S][None, :, :]

    # 1) eval-mode path (p = 0): must match x + pe exactly.
    out = positional_encoding_forward(x, pe, dropout_p=0.0)
    jax.block_until_ready(out)
    assert out.shape == (B, S, D)
    assert jnp.allclose(out, ref, atol=1e-5, rtol=1e-5)

    # 2) training path: dropout with inverted scaling (HW PRNG on TPU, bits off-TPU).
    out_d = positional_encoding_forward(x, pe, dropout_p=dropout_p, seed=1234)
    jax.block_until_ready(out_d)
    keep_prob = 1.0 - dropout_p
    # Surviving elements must equal (x + pe) after undoing the 1/keep_prob scale.
    recon = jnp.where(out_d == 0.0, ref, out_d * keep_prob)
    assert jnp.allclose(recon, ref, atol=1e-5, rtol=1e-5)
    drop_frac = float(jnp.mean((out_d == 0.0).astype(jnp.float32)))
    assert 0.02 < drop_frac < 0.6, drop_frac

    print("KERNEL_OK")
</pallas_src>

<mosaic_0001>
module attributes {stable_mosaic.version = 11 : i64} {
  func.func @_add_pe_kernel(%arg0: i32, %arg1: memref<2x256xf32, #tpu.memory_space<vmem>>, %arg2: memref<2x256xf32, #tpu.memory_space<vmem>>, %arg3: memref<2x256xf32, #tpu.memory_space<vmem>>) attributes {dimension_semantics = [#tpu.dimension_semantics<parallel>], iteration_bounds = array<i64: 1>, scalar_prefetch = 0 : i64, scratch_operands = 0 : i64, tpu.core_type = #tpu.core_type<tc>, window_params = [{transform_indices = @transform_0, window_bounds = array<i64: 2, 256>}, {pipeline_mode = #tpu.pipeline_mode<synchronous>, transform_indices = @transform_1, window_bounds = array<i64: 2, 256>}, {transform_indices = @transform_2, window_bounds = array<i64: 2, 256>}]} {
    %c0 = arith.constant 0 : index
    %c0_0 = arith.constant 0 : index
    %0 = vector.load %arg1[%c0, %c0_0] : memref<2x256xf32, #tpu.memory_space<vmem>>, vector<2x256xf32>
    %c0_1 = arith.constant 0 : index
    %c0_2 = arith.constant 0 : index
    %1 = vector.load %arg2[%c0_1, %c0_2] : memref<2x256xf32, #tpu.memory_space<vmem>>, vector<2x256xf32>
    %2 = arith.addf %0, %1 : vector<2x256xf32>
    %c0_3 = arith.constant 0 : index
    %c0_4 = arith.constant 0 : index
    %3 = vector.load %arg3[%c0_3, %c0_4] : memref<2x256xf32, #tpu.memory_space<vmem>>, vector<2x256xf32>
    tpu.vector_store %arg3[%c0_3, %c0_4], %2 {strides = array<i32>} : memref<2x256xf32, #tpu.memory_space<vmem>>, vector<2x256xf32>,
    return
  }
  func.func @transform_0(%arg0: i32) -> (i32, i32) {
    %c0_i32 = arith.constant 0 : i32
    %c0_i32_0 = arith.constant 0 : i32
    return %arg0, %c0_i32 : i32, i32
  }
  func.func @transform_1(%arg0: i32) -> (i32, i32) {
    %c0_i32 = arith.constant 0 : i32
    %c0_i32_0 = arith.constant 0 : i32
    %c0_i32_1 = arith.constant 0 : i32
    return %c0_i32, %c0_i32_0 : i32, i32
  }
  func.func @transform_2(%arg0: i32) -> (i32, i32) {
    %c0_i32 = arith.constant 0 : i32
    %c0_i32_0 = arith.constant 0 : i32
    return %arg0, %c0_i32 : i32, i32
  }
}

</mosaic_0001>

<llo_original>
// kernel: tpu_custom_call.1
$region0: #{tpu_custom_call.1}
  #allocation0 [shape = 'u32[]', space=smem, size = 0x4, offset = 0x4, fixed_abs, tag = 'smem constant byte address 0x4 - core index']
  #allocation1 [shape = 'u32[72,128]{1,0:T(1,128)}', space=vmem, size = 0x9000, scoped, tag = 'internal scratch']
  %s0 = inlined_call_operand.hbm [shape: f32[2,256], index: 0, kind: input, shape index: {}]
  %s1 = inlined_call_operand.hbm [shape: f32[2,256], index: 1, kind: input, shape index: {}]
  %s2 = inlined_call_operand.hbm [shape: f32[2,256], index: 2, kind: output, shape index: {}]
  %s3 = sld [smem:[#allocation0]]
  $region26: #{tpu_custom_call.1} parent=0
    _
  %s5 = ssub.s32 1, %s3
  %s6 = scalar_select 0, %s5, %s3
  $region1: #{tpu_custom_call.1} parent=0
    #allocation2 [shape = 'u8[2048]{0}', space=vmem, size = 0x800, scoped, tag = 'input window, operand 0, single buffered']
    #allocation3 [shape = 's32[1]{0}', space=sflag, size = 0x4, scoped, tag = 'scoped memory for tpu_custom_call.1']
    #allocation4 [shape = 's32[1]{0}', space=sflag, size = 0x4, scoped, tag = 'scoped memory for tpu_custom_call.1']
    #allocation5 [shape = 'u8[2048]{0}', space=vmem, size = 0x800, scoped, tag = 'input window, operand 1, single buffered']
    #allocation6 [shape = 's32[1]{0}', space=sflag, size = 0x4, scoped, tag = 'scoped memory for tpu_custom_call.1']
    #allocation7 [shape = 'u8[2048]{0}', space=vmem, size = 0x800, scoped, tag = 'output window, operand 0, single buffered']
    %7 = vsyncpa [#allocation3], 0
    %8 = vsyncpa [#allocation6], 0
    %9 = vsyncpa [#allocation4], 0
    // Predicated region
    $region2: #{tpu_custom_call.1} parent=1 // pred_check
      _
    $region3: #{tpu_custom_call.1} parent=1 // pred_check_branch
      %11 = sbr.rel (0) target = $region5
    $region4: #{tpu_custom_call.1} parent=1 // pred_region
      %13 = vsyncadd [#allocation3], 0
      %s15 = sshll.u32 %s0, 4
      %s16 = int_to_ptr.hbm [resolvable:$true] %s15
      %s17 = sshll.u32 [#allocation2], 4
      %s18 = int_to_ptr.vmem [resolvable:$true] %s17
      %20 = dma.hbm_to_vmem [thread:$0]  %s16, 64, %s18, [#allocation3]
    $region5: #{tpu_custom_call.1} parent=1 // pred_fallthru
      _
    // Predicated region
    $region6: #{tpu_custom_call.1} parent=1 // pred_check
      _
    $region7: #{tpu_custom_call.1} parent=1 // pred_check_branch
      %22 = sbr.rel (0) target = $region9
    $region8: #{tpu_custom_call.1} parent=1 // pred_region
      %24 = vsyncadd [#allocation6], 0
      %s26 = sshll.u32 %s1, 4
      %s27 = int_to_ptr.hbm [resolvable:$true] %s26
      %s28 = sshll.u32 [#allocation5], 4
      %s29 = int_to_ptr.vmem [resolvable:$true] %s28
      %31 = dma.hbm_to_vmem [thread:$0]  %s27, 64, %s29, [#allocation6]
    $region9: #{tpu_custom_call.1} parent=1 // pred_fallthru
      _
    // Predicated region
    $region10: #{tpu_custom_call.1} parent=1 // pred_check
      _
    $region11: #{tpu_custom_call.1} parent=1 // pred_check_branch
      %33 = sbr.rel (0) target = $region13
    $region12: #{tpu_custom_call.1} parent=1 // pred_region
      %35 = dma.done [#allocation3], 64
    $region13: #{tpu_custom_call.1} parent=1 // pred_fallthru
      _
    // Predicated region
    $region14: #{tpu_custom_call.1} parent=1 // pred_check
      _
    $region15: #{tpu_custom_call.1} parent=1 // pred_check_branch
      %37 = sbr.rel (0) target = $region17
    $region16: #{tpu_custom_call.1} parent=1 // pred_region
      %39 = dma.done [#allocation6], 64
    $region17: #{tpu_custom_call.1} parent=1 // pred_fallthru
      _
    %v40 = vld [vmem:[#allocation2] sm:$0xf]
    %v41 = vld [vmem:[#allocation5] sm:$0xf]
    %v42 = vadd.f32 %v40, %v41
    %43 = vst [vmem:[#allocation7] sm:$0xf] %v42
    // Predicated region
    $region18: #{tpu_custom_call.1} parent=1 // pred_check
      _
    $region19: #{tpu_custom_call.1} parent=1 // pred_check_branch
      %45 = sbr.rel (0) target = $region21
    $region20: #{tpu_custom_call.1} parent=1 // pred_region
      %47 = vsyncadd [#allocation4], 0
      %s49 = sshll.u32 [#allocation7], 4
      %s50 = int_to_ptr.vmem [resolvable:$true] %s49
      %s51 = sshll.u32 %s2, 4
      %s52 = int_to_ptr.hbm [resolvable:$true] %s51
      %54 = dma.vmem_to_hbm [thread:$0]  %s50, 64, %s52, [#allocation4]
    $region21: #{tpu_custom_call.1} parent=1 // pred_fallthru
      _
    // Predicated region
    $region22: #{tpu_custom_call.1} parent=1 // pred_check
      _
    $region23: #{tpu_custom_call.1} parent=1 // pred_check_branch
      %56 = sbr.rel (0) target = $region25
    $region24: #{tpu_custom_call.1} parent=1 // pred_region
      %58 = dma.done [#allocation4], 64
    $region25: #{tpu_custom_call.1} parent=1 // pred_fallthru
      _
    %59 = vsyncpa [#allocation3], 1
    %60 = vsyncpa [#allocation6], 1
    %61 = vsyncpa [#allocation4], 1

</llo_original>
